<compile_context>
chip_gen: v5e
topology: v5e:2x2
jax: 0.10.0
libtpu: 0.0.40
codegen_flags: <defaults>
</compile_context>

<pallas_src>
import functools

import jax
import jax.numpy as jnp
from jax.experimental import pallas as pl
from jax.experimental.pallas import tpu as pltpu


def _round_up(x, m):
    return ((x + m - 1) // m) * m


def _bn_pad_kernel(scale_ref, shift_ref, x_ref, o_ref, *, H, W, pad, rg):
    """One grid step: `bb` flattened (n, c) planes.

    scale_ref, shift_ref : VMEM (bb, 1)      float32 (per-row == per-channel)
    x_ref                : VMEM (bb, H*W)    flattened input planes
    o_ref                : VMEM (bb, Ho*Wo)  flattened padded output planes
    """
    Wo = W + 2 * pad
    bb, HoWo = o_ref.shape
    n_groups = bb // rg
    LANE_CHUNK = 256  # bounds per-statement width for the border fill

    def group_body(g, carry):
        r0 = pl.multiple_of(g * rg, rg)
        rows = pl.ds(r0, rg)
        scale = scale_ref[rows, :]          # (rg, 1) f32
        shift = shift_ref[rows, :]          # (rg, 1) f32 == BN(0) == pad value

        if pad > 0:
            # Border fill: dense full-lane stores of the per-channel pad value,
            # chunked along lanes to keep vreg live ranges bounded.
            fill = shift.astype(o_ref.dtype)
            for c0 in range(0, HoWo, LANE_CHUNK):
                c1 = min(c0 + LANE_CHUNK, HoWo)
                o_ref[rows, c0:c1] = jnp.broadcast_to(fill, (rg, c1 - c0))

        # Interior: one input row at a time.  All offsets are trace-time
        # constants; each store is a lane-rotate + (masked) store that overlaps
        # with the DMAs of neighbouring grid steps.
        for i in range(H):
            row = x_ref[rows, i * W:(i + 1) * W].astype(jnp.float32)   # (rg, W)
            dst = (pad + i) * Wo + pad
            o_ref[rows, dst:dst + W] = (row * scale + shift).astype(o_ref.dtype)
        return carry

    jax.lax.fori_loop(0, n_groups, group_body, 0)


def bn_and_pad(x, gamma, beta, running_mean, running_var, *, pad_pixels, eps=1e-5):
    """Equivalent of BNAndPadLayer.forward (eval mode) on NCHW input."""
    N, C, H, W = x.shape
    pad = int(pad_pixels)
    Ho, Wo = H + 2 * pad, W + 2 * pad
    NC, HW, HoWo = N * C, H * W, Ho * Wo
    isz = jnp.dtype(x.dtype).itemsize

    # Fold eval-mode BN into per-channel scale/shift (float32 for accuracy).
    inv_std = jax.lax.rsqrt(running_var.astype(jnp.float32) + eps)
    scale = gamma.astype(jnp.float32) * inv_std
    shift = beta.astype(jnp.float32) - running_mean.astype(jnp.float32) * scale
    # One row per (n, c): channel index sits on the sublane axis, so the
    # in-kernel broadcast along lanes is free.  Tiny arrays (N*C*4 bytes).
    scale_r = jnp.tile(scale, N).reshape(NC, 1)
    shift_r = jnp.tile(shift, N).reshape(NC, 1)

    # Lane-dense flattened views (element order unchanged -> free reshapes).
    x_flat = x.reshape(NC, HW)

    # ---- generation-aware block sizing -------------------------------------
    try:
        vmem_cap = int(getattr(pltpu.get_tpu_info(), "vmem_capacity_bytes", 64 << 20))
    except Exception:  # pragma: no cover - conservative fallback off-TPU paths
        vmem_cap = 64 << 20
    # ~16 MiB blocks on 128 MiB parts (v5e/v6e), ~8 MiB on v7x (64 MiB VMEM);
    # double-buffered total stays well under half of physical VMEM.
    target_block = min(16 << 20, vmem_cap // 8)

    # Exact tiled VMEM bytes per row: x + out (lane-padded to 128) plus the two
    # (bb, 1) parameter columns (one 128-lane vreg row each).
    per_row = (_round_up(HW, 128) + _round_up(HoWo, 128)) * isz + 2 * 128 * 4

    # Row-group size: bounds per-statement live vregs inside the kernel.
    tiles_w = -(-W // 128)
    rg = max(8, min(64, (16 // max(1, tiles_w)) * 8))

    if NC < 8:
        bb = NC            # block spans the whole (tiny) leading dim
        rg = NC
    else:
        bb = max(8, (target_block // per_row) // 8 * 8)
        if NC >= 32:
            # Keep >= 4 grid steps so the v7x megacore can shard the grid.
            bb = min(bb, _round_up(pl.cdiv(NC, 4), 8))
        bb = min(bb, (NC // 8) * 8)   # multiple of 8 sublanes, never > array
        rg = min(rg, bb)
        bb = max(rg, (bb // rg) * rg)  # whole number of row groups per block

    grid = (pl.cdiv(NC, bb),)
    block_bytes = _round_up(bb, 8) * per_row
    vmem_limit = int(min(vmem_cap * 3 // 4,
                         max(2 * block_bytes + (16 << 20), 32 << 20)))

    kernel = functools.partial(_bn_pad_kernel, H=H, W=W, pad=pad, rg=rg)

    bytes_accessed = (NC * HW + NC * HoWo) * isz + 2 * NC * 4

    out_flat = pl.pallas_call(
        kernel,
        out_shape=jax.ShapeDtypeStruct((NC, HoWo), x.dtype),
        grid=grid,
        in_specs=[
            pl.BlockSpec((bb, 1), lambda i: (i, 0)),    # scale (per-channel)
            pl.BlockSpec((bb, 1), lambda i: (i, 0)),    # shift (pad value)
            pl.BlockSpec((bb, HW), lambda i: (i, 0)),   # x (flattened planes)
        ],
        out_specs=pl.BlockSpec((bb, HoWo), lambda i: (i, 0)),
        compiler_params=pltpu.CompilerParams(
            dimension_semantics=("parallel",),
            vmem_limit_bytes=vmem_limit,
        ),
        cost_estimate=pl.CostEstimate(
            flops=int(2 * NC * HW),
            transcendentals=0,
            bytes_accessed=int(bytes_accessed),
        ),
    )(scale_r, shift_r, x_flat)

    return out_flat.reshape(N, C, Ho, Wo)


def _reference(x, gamma, beta, mean, var, pad, eps):
    """Plain-JAX reference matching the PyTorch forward (eval mode)."""
    inv_std = 1.0 / jnp.sqrt(var + eps)
    y = (x - mean[None, :, None, None]) * (gamma * inv_std)[None, :, None, None] \
        + beta[None, :, None, None]
    if pad == 0:
        return y
    pad_vals = beta - mean * gamma * inv_std
    out = jnp.pad(y, ((0, 0), (0, 0), (pad, pad), (pad, pad)))
    pv = pad_vals[None, :, None, None]
    out = out.at[:, :, 0:pad, :].set(pv)
    out = out.at[:, :, -pad:, :].set(pv)
    out = out.at[:, :, :, 0:pad].set(pv)
    out = out.at[:, :, :, -pad:].set(pv)
    return out


if __name__ == "__main__":
    key = jax.random.PRNGKey(0)
    N, C, H, W = 2, 4, 16, 16
    pad_pixels = 1
    eps = 1e-5

    k_x, k_g, k_b, k_m, k_v = jax.random.split(key, 5)
    x = jax.random.normal(k_x, (N, C, H, W), dtype=jnp.float32)
    # Deterministic "parameters" (affine=True BatchNorm2d state, C features).
    gamma = 1.0 + 0.1 * jax.random.normal(k_g, (C,), dtype=jnp.float32)
    beta = 0.1 * jax.random.normal(k_b, (C,), dtype=jnp.float32)
    running_mean = 0.05 * jax.random.normal(k_m, (C,), dtype=jnp.float32)
    running_var = jnp.abs(1.0 + 0.1 * jax.random.normal(k_v, (C,), dtype=jnp.float32))

    out = bn_and_pad(x, gamma, beta, running_mean, running_var,
                     pad_pixels=pad_pixels, eps=eps)
    out = jax.block_until_ready(out)

    ref = _reference(x, gamma, beta, running_mean, running_var, pad_pixels, eps)
    assert out.shape == (N, C, H + 2 * pad_pixels, W + 2 * pad_pixels)
    assert jnp.allclose(out, ref, atol=1e-5, rtol=1e-5), "mismatch vs reference"

    print("KERNEL_OK")
</pallas_src>

<mosaic_0001>
module attributes {stable_mosaic.version = 11 : i64} {
  func.func @_bn_pad_kernel(%arg0: i32, %arg1: memref<8x1xf32, #tpu.memory_space<vmem>>, %arg2: memref<8x1xf32, #tpu.memory_space<vmem>>, %arg3: memref<8x256xf32, #tpu.memory_space<vmem>>, %arg4: memref<8x324xf32, #tpu.memory_space<vmem>>) attributes {dimension_semantics = [#tpu.dimension_semantics<parallel>], iteration_bounds = array<i64: 1>, scalar_prefetch = 0 : i64, scratch_operands = 0 : i64, tpu.core_type = #tpu.core_type<tc>, window_params = [{transform_indices = @transform_0, window_bounds = array<i64: 8, 1>}, {transform_indices = @transform_1, window_bounds = array<i64: 8, 1>}, {transform_indices = @transform_2, window_bounds = array<i64: 8, 256>}, {transform_indices = @transform_3, window_bounds = array<i64: 8, 324>}]} {
    %c0_i32 = arith.constant 0 : i32
    %c8_i32 = arith.constant 8 : i32
    %0 = arith.muli %c0_i32, %c8_i32 : i32
    %1 = tpu.assume_multiple %0, 8 : i32
    %2 = arith.index_cast %1 : i32 to index
    %c0 = arith.constant 0 : index
    %3 = vector.load %arg1[%2, %c0] : memref<8x1xf32, #tpu.memory_space<vmem>>, vector<8x1xf32>
    %4 = arith.index_cast %1 : i32 to index
    %c0_0 = arith.constant 0 : index
    %5 = vector.load %arg2[%4, %c0_0] : memref<8x1xf32, #tpu.memory_space<vmem>>, vector<8x1xf32>
    %6 = vector.shape_cast %5 : vector<8x1xf32> to vector<8x1xf32>
    %7 = vector.broadcast %6 : vector<8x1xf32> to vector<8x256xf32>
    %8 = arith.index_cast %1 : i32 to index
    %c0_1 = arith.constant 0 : index
    %9 = vector.load %arg4[%8, %c0_1] : memref<8x324xf32, #tpu.memory_space<vmem>>, vector<8x256xf32>
    tpu.vector_store %arg4[%8, %c0_1], %7 {strides = array<i32>} : memref<8x324xf32, #tpu.memory_space<vmem>>, vector<8x256xf32>,
    %10 = vector.shape_cast %5 : vector<8x1xf32> to vector<8x1xf32>
    %11 = vector.broadcast %10 : vector<8x1xf32> to vector<8x68xf32>
    %12 = arith.index_cast %1 : i32 to index
    %c256 = arith.constant 256 : index
    %13 = vector.load %arg4[%12, %c256] : memref<8x324xf32, #tpu.memory_space<vmem>>, vector<8x68xf32>
    tpu.vector_store %arg4[%12, %c256], %11 {strides = array<i32>} : memref<8x324xf32, #tpu.memory_space<vmem>>, vector<8x68xf32>,
    %14 = arith.index_cast %1 : i32 to index
    %c0_2 = arith.constant 0 : index
    %15 = vector.load %arg3[%14, %c0_2] : memref<8x256xf32, #tpu.memory_space<vmem>>, vector<8x16xf32>
    %16 = vector.broadcast %3 : vector<8x1xf32> to vector<8x16xf32>
    %17 = arith.mulf %15, %16 : vector<8x16xf32>
    %18 = vector.broadcast %5 : vector<8x1xf32> to vector<8x16xf32>
    %19 = arith.addf %17, %18 : vector<8x16xf32>
    %20 = arith.index_cast %1 : i32 to index
    %c19 = arith.constant 19 : index
    %21 = vector.load %arg4[%20, %c19] : memref<8x324xf32, #tpu.memory_space<vmem>>, vector<8x16xf32>
    tpu.vector_store %arg4[%20, %c19], %19 {strides = array<i32>} : memref<8x324xf32, #tpu.memory_space<vmem>>, vector<8x16xf32>,
    %22 = arith.index_cast %1 : i32 to index
    %c16 = arith.constant 16 : index
    %23 = vector.load %arg3[%22, %c16] : memref<8x256xf32, #tpu.memory_space<vmem>>, vector<8x16xf32>
    %24 = vector.broadcast %3 : vector<8x1xf32> to vector<8x16xf32>
    %25 = arith.mulf %23, %24 : vector<8x16xf32>
    %26 = vector.broadcast %5 : vector<8x1xf32> to vector<8x16xf32>
    %27 = arith.addf %25, %26 : vector<8x16xf32>
    %28 = arith.index_cast %1 : i32 to index
    %c37 = arith.constant 37 : index
    %29 = vector.load %arg4[%28, %c37] : memref<8x324xf32, #tpu.memory_space<vmem>>, vector<8x16xf32>
    tpu.vector_store %arg4[%28, %c37], %27 {strides = array<i32>} : memref<8x324xf32, #tpu.memory_space<vmem>>, vector<8x16xf32>,
    %30 = arith.index_cast %1 : i32 to index
    %c32 = arith.constant 32 : index
    %31 = vector.load %arg3[%30, %c32] : memref<8x256xf32, #tpu.memory_space<vmem>>, vector<8x16xf32>
    %32 = vector.broadcast %3 : vector<8x1xf32> to vector<8x16xf32>
    %33 = arith.mulf %31, %32 : vector<8x16xf32>
    %34 = vector.broadcast %5 : vector<8x1xf32> to vector<8x16xf32>
    %35 = arith.addf %33, %34 : vector<8x16xf32>
    %36 = arith.index_cast %1 : i32 to index
    %c55 = arith.constant 55 : index
    %37 = vector.load %arg4[%36, %c55] : memref<8x324xf32, #tpu.memory_space<vmem>>, vector<8x16xf32>
    tpu.vector_store %arg4[%36, %c55], %35 {strides = array<i32>} : memref<8x324xf32, #tpu.memory_space<vmem>>, vector<8x16xf32>,
    %38 = arith.index_cast %1 : i32 to index
    %c48 = arith.constant 48 : index
    %39 = vector.load %arg3[%38, %c48] : memref<8x256xf32, #tpu.memory_space<vmem>>, vector<8x16xf32>
    %40 = vector.broadcast %3 : vector<8x1xf32> to vector<8x16xf32>
    %41 = arith.mulf %39, %40 : vector<8x16xf32>
    %42 = vector.broadcast %5 : vector<8x1xf32> to vector<8x16xf32>
    %43 = arith.addf %41, %42 : vector<8x16xf32>
    %44 = arith.index_cast %1 : i32 to index
    %c73 = arith.constant 73 : index
    %45 = vector.load %arg4[%44, %c73] : memref<8x324xf32, #tpu.memory_space<vmem>>, vector<8x16xf32>
    tpu.vector_store %arg4[%44, %c73], %43 {strides = array<i32>} : memref<8x324xf32, #tpu.memory_space<vmem>>, vector<8x16xf32>,
    %46 = arith.index_cast %1 : i32 to index
    %c64 = arith.constant 64 : index
    %47 = vector.load %arg3[%46, %c64] : memref<8x256xf32, #tpu.memory_space<vmem>>, vector<8x16xf32>
    %48 = vector.broadcast %3 : vector<8x1xf32> to vector<8x16xf32>
    %49 = arith.mulf %47, %48 : vector<8x16xf32>
    %50 = vector.broadcast %5 : vector<8x1xf32> to vector<8x16xf32>
    %51 = arith.addf %49, %50 : vector<8x16xf32>
    %52 = arith.index_cast %1 : i32 to index
    %c91 = arith.constant 91 : index
    %53 = vector.load %arg4[%52, %c91] : memref<8x324xf32, #tpu.memory_space<vmem>>, vector<8x16xf32>
    tpu.vector_store %arg4[%52, %c91], %51 {strides = array<i32>} : memref<8x324xf32, #tpu.memory_space<vmem>>, vector<8x16xf32>,
    %54 = arith.index_cast %1 : i32 to index
    %c80 = arith.constant 80 : index
    %55 = vector.load %arg3[%54, %c80] : memref<8x256xf32, #tpu.memory_space<vmem>>, vector<8x16xf32>
    %56 = vector.broadcast %3 : vector<8x1xf32> to vector<8x16xf32>
    %57 = arith.mulf %55, %56 : vector<8x16xf32>
    %58 = vector.broadcast %5 : vector<8x1xf32> to vector<8x16xf32>
    %59 = arith.addf %57, %58 : vector<8x16xf32>
    %60 = arith.index_cast %1 : i32 to index
    %c109 = arith.constant 109 : index
    %61 = vector.load %arg4[%60, %c109] : memref<8x324xf32, #tpu.memory_space<vmem>>, vector<8x16xf32>
    tpu.vector_store %arg4[%60, %c109], %59 {strides = array<i32>} : memref<8x324xf32, #tpu.memory_space<vmem>>, vector<8x16xf32>,
    %62 = arith.index_cast %1 : i32 to index
    %c96 = arith.constant 96 : index
    %63 = vector.load %arg3[%62, %c96] : memref<8x256xf32, #tpu.memory_space<vmem>>, vector<8x16xf32>
    %64 = vector.broadcast %3 : vector<8x1xf32> to vector<8x16xf32>
    %65 = arith.mulf %63, %64 : vector<8x16xf32>
    %66 = vector.broadcast %5 : vector<8x1xf32> to vector<8x16xf32>
    %67 = arith.addf %65, %66 : vector<8x16xf32>
    %68 = arith.index_cast %1 : i32 to index
    %c127 = arith.constant 127 : index
    %69 = vector.load %arg4[%68, %c127] : memref<8x324xf32, #tpu.memory_space<vmem>>, vector<8x16xf32>
    tpu.vector_store %arg4[%68, %c127], %67 {strides = array<i32>} : memref<8x324xf32, #tpu.memory_space<vmem>>, vector<8x16xf32>,
    %70 = arith.index_cast %1 : i32 to index
    %c112 = arith.constant 112 : index
    %71 = vector.load %arg3[%70, %c112] : memref<8x256xf32, #tpu.memory_space<vmem>>, vector<8x16xf32>
    %72 = vector.broadcast %3 : vector<8x1xf32> to vector<8x16xf32>
    %73 = arith.mulf %71, %72 : vector<8x16xf32>
    %74 = vector.broadcast %5 : vector<8x1xf32> to vector<8x16xf32>
    %75 = arith.addf %73, %74 : vector<8x16xf32>
    %76 = arith.index_cast %1 : i32 to index
    %c145 = arith.constant 145 : index
    %77 = vector.load %arg4[%76, %c145] : memref<8x324xf32, #tpu.memory_space<vmem>>, vector<8x16xf32>
    tpu.vector_store %arg4[%76, %c145], %75 {strides = array<i32>} : memref<8x324xf32, #tpu.memory_space<vmem>>, vector<8x16xf32>,
    %78 = arith.index_cast %1 : i32 to index
    %c128 = arith.constant 128 : index
    %79 = vector.load %arg3[%78, %c128] : memref<8x256xf32, #tpu.memory_space<vmem>>, vector<8x16xf32>
    %80 = vector.broadcast %3 : vector<8x1xf32> to vector<8x16xf32>
    %81 = arith.mulf %79, %80 : vector<8x16xf32>
    %82 = vector.broadcast %5 : vector<8x1xf32> to vector<8x16xf32>
    %83 = arith.addf %81, %82 : vector<8x16xf32>
    %84 = arith.index_cast %1 : i32 to index
    %c163 = arith.constant 163 : index
    %85 = vector.load %arg4[%84, %c163] : memref<8x324xf32, #tpu.memory_space<vmem>>, vector<8x16xf32>
    tpu.vector_store %arg4[%84, %c163], %83 {strides = array<i32>} : memref<8x324xf32, #tpu.memory_space<vmem>>, vector<8x16xf32>,
    %86 = arith.index_cast %1 : i32 to index
    %c144 = arith.constant 144 : index
    %87 = vector.load %arg3[%86, %c144] : memref<8x256xf32, #tpu.memory_space<vmem>>, vector<8x16xf32>
    %88 = vector.broadcast %3 : vector<8x1xf32> to vector<8x16xf32>
    %89 = arith.mulf %87, %88 : vector<8x16xf32>
    %90 = vector.broadcast %5 : vector<8x1xf32> to vector<8x16xf32>
    %91 = arith.addf %89, %90 : vector<8x16xf32>
    %92 = arith.index_cast %1 : i32 to index
    %c181 = arith.constant 181 : index
    %93 = vector.load %arg4[%92, %c181] : memref<8x324xf32, #tpu.memory_space<vmem>>, vector<8x16xf32>
    tpu.vector_store %arg4[%92, %c181], %91 {strides = array<i32>} : memref<8x324xf32, #tpu.memory_space<vmem>>, vector<8x16xf32>,
    %94 = arith.index_cast %1 : i32 to index
    %c160 = arith.constant 160 : index
    %95 = vector.load %arg3[%94, %c160] : memref<8x256xf32, #tpu.memory_space<vmem>>, vector<8x16xf32>
    %96 = vector.broadcast %3 : vector<8x1xf32> to vector<8x16xf32>
    %97 = arith.mulf %95, %96 : vector<8x16xf32>
    %98 = vector.broadcast %5 : vector<8x1xf32> to vector<8x16xf32>
    %99 = arith.addf %97, %98 : vector<8x16xf32>
    %100 = arith.index_cast %1 : i32 to index
    %c199 = arith.constant 199 : index
    %101 = vector.load %arg4[%100, %c199] : memref<8x324xf32, #tpu.memory_space<vmem>>, vector<8x16xf32>
    tpu.vector_store %arg4[%100, %c199], %99 {strides = array<i32>} : memref<8x324xf32, #tpu.memory_space<vmem>>, vector<8x16xf32>,
    %102 = arith.index_cast %1 : i32 to index
    %c176 = arith.constant 176 : index
    %103 = vector.load %arg3[%102, %c176] : memref<8x256xf32, #tpu.memory_space<vmem>>, vector<8x16xf32>
    %104 = vector.broadcast %3 : vector<8x1xf32> to vector<8x16xf32>
    %105 = arith.mulf %103, %104 : vector<8x16xf32>
    %106 = vector.broadcast %5 : vector<8x1xf32> to vector<8x16xf32>
    %107 = arith.addf %105, %106 : vector<8x16xf32>
    %108 = arith.index_cast %1 : i32 to index
    %c217 = arith.constant 217 : index
    %109 = vector.load %arg4[%108, %c217] : memref<8x324xf32, #tpu.memory_space<vmem>>, vector<8x16xf32>
    tpu.vector_store %arg4[%108, %c217], %107 {strides = array<i32>} : memref<8x324xf32, #tpu.memory_space<vmem>>, vector<8x16xf32>,
    %110 = arith.index_cast %1 : i32 to index
    %c192 = arith.constant 192 : index
    %111 = vector.load %arg3[%110, %c192] : memref<8x256xf32, #tpu.memory_space<vmem>>, vector<8x16xf32>
    %112 = vector.broadcast %3 : vector<8x1xf32> to vector<8x16xf32>
    %113 = arith.mulf %111, %112 : vector<8x16xf32>
    %114 = vector.broadcast %5 : vector<8x1xf32> to vector<8x16xf32>
    %115 = arith.addf %113, %114 : vector<8x16xf32>
    %116 = arith.index_cast %1 : i32 to index
    %c235 = arith.constant 235 : index
    %117 = vector.load %arg4[%116, %c235] : memref<8x324xf32, #tpu.memory_space<vmem>>, vector<8x16xf32>
    tpu.vector_store %arg4[%116, %c235], %115 {strides = array<i32>} : memref<8x324xf32, #tpu.memory_space<vmem>>, vector<8x16xf32>,
    %118 = arith.index_cast %1 : i32 to index
    %c208 = arith.constant 208 : index
    %119 = vector.load %arg3[%118, %c208] : memref<8x256xf32, #tpu.memory_space<vmem>>, vector<8x16xf32>
    %120 = vector.broadcast %3 : vector<8x1xf32> to vector<8x16xf32>
    %121 = arith.mulf %119, %120 : vector<8x16xf32>
    %122 = vector.broadcast %5 : vector<8x1xf32> to vector<8x16xf32>
    %123 = arith.addf %121, %122 : vector<8x16xf32>
    %124 = arith.index_cast %1 : i32 to index
    %c253 = arith.constant 253 : index
    %125 = vector.load %arg4[%124, %c253] : memref<8x324xf32, #tpu.memory_space<vmem>>, vector<8x16xf32>
    tpu.vector_store %arg4[%124, %c253], %123 {strides = array<i32>} : memref<8x324xf32, #tpu.memory_space<vmem>>, vector<8x16xf32>,
    %126 = arith.index_cast %1 : i32 to index
    %c224 = arith.constant 224 : index
    %127 = vector.load %arg3[%126, %c224] : memref<8x256xf32, #tpu.memory_space<vmem>>, vector<8x16xf32>
    %128 = vector.broadcast %3 : vector<8x1xf32> to vector<8x16xf32>
    %129 = arith.mulf %127, %128 : vector<8x16xf32>
    %130 = vector.broadcast %5 : vector<8x1xf32> to vector<8x16xf32>
    %131 = arith.addf %129, %130 : vector<8x16xf32>
    %132 = arith.index_cast %1 : i32 to index
    %c271 = arith.constant 271 : index
    %133 = vector.load %arg4[%132, %c271] : memref<8x324xf32, #tpu.memory_space<vmem>>, vector<8x16xf32>
    tpu.vector_store %arg4[%132, %c271], %131 {strides = array<i32>} : memref<8x324xf32, #tpu.memory_space<vmem>>, vector<8x16xf32>,
    %134 = arith.index_cast %1 : i32 to index
    %c240 = arith.constant 240 : index
    %135 = vector.load %arg3[%134, %c240] : memref<8x256xf32, #tpu.memory_space<vmem>>, vector<8x16xf32>
    %136 = vector.broadcast %3 : vector<8x1xf32> to vector<8x16xf32>
    %137 = arith.mulf %135, %136 : vector<8x16xf32>
    %138 = vector.broadcast %5 : vector<8x1xf32> to vector<8x16xf32>
    %139 = arith.addf %137, %138 : vector<8x16xf32>
    %140 = arith.index_cast %1 : i32 to index
    %c289 = arith.constant 289 : index
    %141 = vector.load %arg4[%140, %c289] : memref<8x324xf32, #tpu.memory_space<vmem>>, vector<8x16xf32>
    tpu.vector_store %arg4[%140, %c289], %139 {strides = array<i32>} : memref<8x324xf32, #tpu.memory_space<vmem>>, vector<8x16xf32>,
    %c1_i32 = arith.constant 1 : i32
    return
  }
  func.func @transform_0(%arg0: i32) -> (i32, i32) {
    %c0_i32 = arith.constant 0 : i32
    %c0_i32_0 = arith.constant 0 : i32
    return %arg0, %c0_i32 : i32, i32
  }
  func.func @transform_1(%arg0: i32) -> (i32, i32) {
    %c0_i32 = arith.constant 0 : i32
    %c0_i32_0 = arith.constant 0 : i32
    return %arg0, %c0_i32 : i32, i32
  }
  func.func @transform_2(%arg0: i32) -> (i32, i32) {
    %c0_i32 = arith.constant 0 : i32
    %c0_i32_0 = arith.constant 0 : i32
    return %arg0, %c0_i32 : i32, i32
  }
  func.func @transform_3(%arg0: i32) -> (i32, i32) {
    %c0_i32 = arith.constant 0 : i32
    %c0_i32_0 = arith.constant 0 : i32
    return %arg0, %c0_i32 : i32, i32
  }
}

</mosaic_0001>

<llo_original>
// kernel: tpu_custom_call.1
$region0: #{tpu_custom_call.1}
  #allocation0 [shape = 'u32[]', space=smem, size = 0x4, offset = 0x4, fixed_abs, tag = 'smem constant byte address 0x4 - core index']
  #allocation1 [shape = 'u32[72,128]{1,0:T(1,128)}', space=vmem, size = 0x9000, scoped, tag = 'internal scratch']
  %s0 = inlined_call_operand.vmem [shape: f32[8,1], index: 0, kind: input, shape index: {}]
  %s1 = inlined_call_operand.vmem [shape: f32[8,1], index: 1, kind: input, shape index: {}]
  %s2 = inlined_call_operand.vmem [shape: f32[8,256], index: 2, kind: input, shape index: {}]
  %s3 = inlined_call_operand.hbm [shape: f32[8,324], index: 3, kind: output, shape index: {}]
  %s4 = sld [smem:[#allocation0]]
  $region22: #{tpu_custom_call.1} parent=0
    _
  %s6 = ssub.s32 1, %s4
  %s7 = scalar_select 0, %s6, %s4
  $region1: #{tpu_custom_call.1} parent=0
    #allocation2 [shape = 'u8[12288]{0}', space=vmem, size = 0x3000, scoped, tag = 'output window, operand 0, single buffered']
    #allocation3 [shape = 's32[1]{0}', space=sflag, size = 0x4, scoped, tag = 'scoped memory for tpu_custom_call.1']
    %8 = vsyncpa [#allocation3], 0
    // Predicated region
    $region2: #{tpu_custom_call.1} parent=1 // pred_check
      _
    $region3: #{tpu_custom_call.1} parent=1 // pred_check_branch
      %10 = sbr.rel (0) target = $region5
    $region4: #{tpu_custom_call.1} parent=1 // pred_region
      _
    $region5: #{tpu_custom_call.1} parent=1 // pred_fallthru
      _
    // Predicated region
    $region6: #{tpu_custom_call.1} parent=1 // pred_check
      _
    $region7: #{tpu_custom_call.1} parent=1 // pred_check_branch
      %12 = sbr.rel (0) target = $region9
    $region8: #{tpu_custom_call.1} parent=1 // pred_region
      _
    $region9: #{tpu_custom_call.1} parent=1 // pred_fallthru
      _
    // Predicated region
    $region10: #{tpu_custom_call.1} parent=1 // pred_check
      _
    $region11: #{tpu_custom_call.1} parent=1 // pred_check_branch
      %14 = sbr.rel (0) target = $region13
    $region12: #{tpu_custom_call.1} parent=1 // pred_region
      _
    $region13: #{tpu_custom_call.1} parent=1 // pred_fallthru
      _
    %v15 = vld [vmem:[%s0] sm:$0xff]
    %v16 = vld [vmem:[%s1] sm:$0xff]
    %18 = vset.pattern.permute.xlu0 0
    %19 = vperm.xlu0 %18, %v16
    %v20 = vpop.permute.xlu0 %19
    %s22 = smul.u32 0, 3
    %s23 = smul.addr %s22, 8
    %s24 = scalar_lea.vmem [#allocation2], %s23
    %25 = vst [vmem:[%s24] sm:$0xff] %v20
    %26 = vst [vmem:[%s24 + $0x8] sm:$0xff] %v20
    %vm27 = vcmask 556032
    %28 = vst.msk [vmem:[%s24 + $0x10] sm:$0xff] %vm27, %v20
    %s29 = smul.u32 0, 2
    %s30 = smul.addr %s29, 8
    %s31 = scalar_lea.vmem %s2, %s30
    %v32 = vld [vmem:[%s31] sm:$0xff]
    %34 = vset.pattern.permute.xlu0 0
    %35 = vperm.xlu0 %34, %v15
    %v36 = vpop.permute.xlu0 %35
    %v38 = vmul.f32 %v32, %v36
    %v39 = vadd.f32 %v38, %v20
    %41 = vrot.lane.b32.xlu0 %v39, 19
    %v42 = vpop.permute.xlu0 %41
    %vm44 = vcmask 285848
    %45 = vst.msk [vmem:[%s24] sm:$0xff] %vm44, %v42
    %v46 = vld [vmem:[%s31] sm:$0xff]
    %v47 = vmul.f32 %v46, %v36
    %v48 = vadd.f32 %v47, %v20
    %50 = vrot.lane.b32.xlu0 %v48, 21
    %v51 = vpop.permute.xlu0 %50
    %vm53 = vcmask 433448
    %54 = vst.msk [vmem:[%s24] sm:$0xff] %vm53, %v51
    %v55 = vld [vmem:[%s31] sm:$0xff]
    %v56 = vmul.f32 %v55, %v36
    %v57 = vadd.f32 %v56, %v20
    %59 = vrot.lane.b32.xlu0 %v57, 23
    %v60 = vpop.permute.xlu0 %59
    %vm62 = vcmask 581048
    %63 = vst.msk [vmem:[%s24] sm:$0xff] %vm62, %v60
    %v64 = vld [vmem:[%s31] sm:$0xff]
    %v65 = vmul.f32 %v64, %v36
    %v66 = vadd.f32 %v65, %v20
    %68 = vrot.lane.b32.xlu0 %v66, 25
    %v69 = vpop.permute.xlu0 %68
    %vm71 = vcmask 728648
    %72 = vst.msk [vmem:[%s24] sm:$0xff] %vm71, %v69
    %v73 = vld [vmem:[%s31] sm:$0xff]
    %v74 = vmul.f32 %v73, %v36
    %v75 = vadd.f32 %v74, %v20
    %77 = vrot.lane.b32.xlu0 %v75, 27
    %v78 = vpop.permute.xlu0 %77
    %vm80 = vcmask 876248
    %81 = vst.msk [vmem:[%s24] sm:$0xff] %vm80, %v78
    %v82 = vld [vmem:[%s31] sm:$0xff]
    %v83 = vmul.f32 %v82, %v36
    %v84 = vadd.f32 %v83, %v20
    %86 = vrot.lane.b32.xlu0 %v84, 29
    %v87 = vpop.permute.xlu0 %86
    %vm89 = vcmask 1023848
    %90 = vst.msk [vmem:[%s24] sm:$0xff] %vm89, %v87
    %v91 = vld [vmem:[%s31] sm:$0xff]
    %v92 = vmul.f32 %v91, %v36
    %v93 = vadd.f32 %v92, %v20
    %95 = vrot.lane.b32.xlu0 %v93, 31
    %v96 = vpop.permute.xlu0 %95
    %vm98 = vcmask 1048568
    %99 = vst.msk [vmem:[%s24] sm:$0xff] %vm98, %v96
    %vm100 = vcmask 121856
    %101 = vst.msk [vmem:[%s24 + $0x8] sm:$0xff] %vm100, %v96
    %v102 = vld [vmem:[%s31] sm:$0xff]
    %v103 = vmul.f32 %v102, %v36
    %v104 = vadd.f32 %v103, %v20
    %106 = vrot.lane.b32.xlu0 %v104, 33
    %v107 = vpop.permute.xlu0 %106
    %vm109 = vcmask 269448
    %110 = vst.msk [vmem:[%s24 + $0x8] sm:$0xff] %vm109, %v107
    %v111 = vld [vmem:[%s31 + $0x8] sm:$0xff]
    %v112 = vmul.f32 %v111, %v36
    %v113 = vadd.f32 %v112, %v20
    %115 = vrot.lane.b32.xlu0 %v113, 35
    %v116 = vpop.permute.xlu0 %115
    %vm118 = vcmask 417048
    %119 = vst.msk [vmem:[%s24 + $0x8] sm:$0xff] %vm118, %v116
    %v120 = vld [vmem:[%s31 + $0x8] sm:$0xff]
    %v121 = vmul.f32 %v120, %v36
    %v122 = vadd.f32 %v121, %v20
    %124 = vrot.lane.b32.xlu0 %v122, 37
    %v125 = vpop.permute.xlu0 %124
    %vm127 = vcmask 564648
    %128 = vst.msk [vmem:[%s24 + $0x8] sm:$0xff] %vm127, %v125
    %v129 = vld [vmem:[%s31 + $0x8] sm:$0xff]
    %v130 = vmul.f32 %v129, %v36
    %v131 = vadd.f32 %v130, %v20
    %133 = vrot.lane.b32.xlu0 %v131, 39
    %v134 = vpop.permute.xlu0 %133
    %vm136 = vcmask 712248
    %137 = vst.msk [vmem:[%s24 + $0x8] sm:$0xff] %vm136, %v134
    %v138 = vld [vmem:[%s31 + $0x8] sm:$0xff]
    %v139 = vmul.f32 %v138, %v36
    %v140 = vadd.f32 %v139, %v20
    %142 = vrot.lane.b32.xlu0 %v140, 41
    %v143 = vpop.permute.xlu0 %142
    %vm145 = vcmask 859848
    %146 = vst.msk [vmem:[%s24 + $0x8] sm:$0xff] %vm145, %v143
    %v147 = vld [vmem:[%s31 + $0x8] sm:$0xff]
    %v148 = vmul.f32 %v147, %v36
    %v149 = vadd.f32 %v148, %v20
    %151 = vrot.lane.b32.xlu0 %v149, 43
    %v152 = vpop.permute.xlu0 %151
    %vm154 = vcmask 1007448
    %155 = vst.msk [vmem:[%s24 + $0x8] sm:$0xff] %vm154, %v152
    %v156 = vld [vmem:[%s31 + $0x8] sm:$0xff]
    %v157 = vmul.f32 %v156, %v36
    %v158 = vadd.f32 %v157, %v20
    %160 = vrot.lane.b32.xlu0 %v158, 45
    %v161 = vpop.permute.xlu0 %160
    %vm163 = vcmask 1048552
    %164 = vst.msk [vmem:[%s24 + $0x8] sm:$0xff] %vm163, %v161
    %vm165 = vcmask 105472
    %166 = vst.msk [vmem:[%s24 + $0x10] sm:$0xff] %vm165, %v161
    %v167 = vld [vmem:[%s31 + $0x8] sm:$0xff]
    %v168 = vmul.f32 %v167, %v36
    %v169 = vadd.f32 %v168, %v20
    %171 = vrot.lane.b32.xlu0 %v169, 47
    %v172 = vpop.permute.xlu0 %171
    %vm174 = vcmask 253048
    %175 = vst.msk [vmem:[%s24 + $0x10] sm:$0xff] %vm174, %v172
    %v176 = vld [vmem:[%s31 + $0x8] sm:$0xff]
    %v177 = vmul.f32 %v176, %v36
    %v178 = vadd.f32 %v177, %v20
    %180 = vrot.lane.b32.xlu0 %v178, 49
    %v181 = vpop.permute.xlu0 %180
    %vm183 = vcmask 400648
    %184 = vst.msk [vmem:[%s24 + $0x10] sm:$0xff] %vm183, %v181
    // Predicated region
    $region14: #{tpu_custom_call.1} parent=1 // pred_check
      _
    $region15: #{tpu_custom_call.1} parent=1 // pred_check_branch
      %186 = sbr.rel (0) target = $region17
    $region16: #{tpu_custom_call.1} parent=1 // pred_region
      %188 = vsyncadd [#allocation3], 0
      %s190 = sshll.u32 [#allocation2], 4
      %s191 = int_to_ptr.vmem [resolvable:$true] %s190
      %s192 = sshll.u32 %s3, 4
      %s193 = int_to_ptr.hbm [resolvable:$true] %s192
      %195 = dma.vmem_to_hbm [thread:$0]  %s191, 384, %s193, [#allocation3]
    $region17: #{tpu_custom_call.1} parent=1 // pred_fallthru
      _
    // Predicated region
    $region18: #{tpu_custom_call.1} parent=1 // pred_check
      _
    $region19: #{tpu_custom_call.1} parent=1 // pred_check_branch
      %197 = sbr.rel (0) target = $region21
    $region20: #{tpu_custom_call.1} parent=1 // pred_region
      %199 = dma.done [#allocation3], 384
    $region21: #{tpu_custom_call.1} parent=1 // pred_fallthru
      _
    %200 = vsyncpa [#allocation3], 1

</llo_original>
